<compile_context>
chip_gen: v6e
topology: v6e:2x2x1
jax: 0.10.0
libtpu: 0.0.40
codegen_flags: <defaults>
</compile_context>

<pallas_src>
import jax
import jax.numpy as jnp
import numpy as np
from jax import lax
from jax.experimental import pallas as pl
from jax.experimental.pallas import tpu as pltpu


# ---------------------------------------------------------------------------
# Kernel
# ---------------------------------------------------------------------------
def _gcn_mlp_kernel(a_ref, x_ref,
                    w1_ref, b1_ref, w2_ref, b2_ref,
                    w3_ref, b3_ref, w4_ref, b4_ref,
                    out_ref):
    f32 = jnp.float32
    bf16 = jnp.bfloat16

    # Raw adjacency with self loops (bf16, entries exactly 0/1); reused by both
    # GCN layers from VMEM.  In-degree-based symmetric normalization is applied
    # as row scalings of the activations:
    #   Â X W = D^{-1/2} (A + I) D^{-1/2} (X W)
    a = a_ref[0]                                              # [N, N] bf16
    deg = jnp.sum(a.astype(f32), axis=1, keepdims=True)       # [N, 1] f32
    d = jnp.where(deg > 0.0, lax.rsqrt(deg), 0.0)             # D^{-1/2}

    def gcn_layer(h_bf16, w_ref, b_ref):
        h = jnp.dot(h_bf16, w_ref[...], preferred_element_type=f32)   # X W
        h = (h * d).astype(bf16)                                       # D^{-1/2} (X W)
        h = jnp.dot(a, h, preferred_element_type=f32)                  # (A+I) ...
        return h * d + b_ref[...]                                      # D^{-1/2} ... + b

    # GCN layer 1 / 2 (no ReLU in between, per the reference module).
    h = gcn_layer(x_ref[0], w1_ref, b1_ref)
    h = gcn_layer(h.astype(bf16), w2_ref, b2_ref)

    # MLP: ReLU -> Linear(hidden, 64) -> ReLU -> Linear(64, out_dim)
    h = jnp.maximum(h, 0.0)
    h = jnp.dot(h.astype(bf16), w3_ref[...], preferred_element_type=f32) + b3_ref[...]
    h = jnp.maximum(h, 0.0)
    out = jnp.dot(h.astype(bf16), w4_ref[...], preferred_element_type=f32) + b4_ref[...]

    out_ref[0] = out.astype(out_ref.dtype)                    # lane-dense store


# ---------------------------------------------------------------------------
# Wrapper
# ---------------------------------------------------------------------------
def _round_up(v, m):
    return (v + m - 1) // m * m


def _pad_to(arr, axis, target):
    pad = target - arr.shape[axis]
    if pad == 0:
        return arr
    widths = [(0, 0)] * arr.ndim
    widths[axis] = (0, pad)
    return jnp.pad(arr, widths)


def _self_loop_adjacency(edge_index, num_nodes):
    """A + I with A[dst, src] = 1 for every edge src -> dst (bf16-exact 0/1)."""
    src = edge_index[0]
    dst = edge_index[1]
    a = jnp.eye(num_nodes, dtype=jnp.bfloat16)
    return a.at[dst, src].add(jnp.bfloat16(1.0))


def gcn_classifier_forward(x, edge_index, params):
    """x: [B, N, in_dim] f32, edge_index: [B, 2, E] int32 (row0=src, row1=dst)."""
    bsz, n, in_dim = x.shape
    hidden = params["w1"].shape[1]
    mlp_hidden = params["w3"].shape[1]
    out_dim = params["w4"].shape[1]

    in_p = _round_up(in_dim, 128)
    hid_p = _round_up(hidden, 128)
    mlp_p = _round_up(mlp_hidden, 128)
    out_p = _round_up(out_dim, 128)

    # Raw adjacency (scatter stays in XLA; normalization is done in-kernel).
    a = jax.vmap(lambda ei: _self_loop_adjacency(ei, n))(edge_index)  # [B,N,N] bf16

    # bf16 MXU operands, zero-padded to lane-dense shapes (math is exact).
    x_bf = _pad_to(x, 2, in_p).astype(jnp.bfloat16)
    w1 = _pad_to(_pad_to(params["w1"], 0, in_p), 1, hid_p).astype(jnp.bfloat16)
    b1 = _pad_to(params["b1"], 1, hid_p)
    w2 = _pad_to(_pad_to(params["w2"], 0, hid_p), 1, hid_p).astype(jnp.bfloat16)
    b2 = _pad_to(params["b2"], 1, hid_p)
    w3 = _pad_to(_pad_to(params["w3"], 0, hid_p), 1, mlp_p).astype(jnp.bfloat16)
    b3 = _pad_to(params["b3"], 1, mlp_p)
    w4 = _pad_to(_pad_to(params["w4"], 0, mlp_p), 1, out_p).astype(jnp.bfloat16)
    b4 = _pad_to(params["b4"], 1, out_p)

    def batched(shape):
        return pl.BlockSpec((1,) + shape, lambda i: (i, 0, 0))

    def shared(shape):
        return pl.BlockSpec(shape, lambda i: (0, 0))

    out = pl.pallas_call(
        _gcn_mlp_kernel,
        out_shape=jax.ShapeDtypeStruct((bsz, n, out_p), jnp.float32),
        grid=(bsz,),
        in_specs=[
            batched((n, n)),            # A + I
            batched((n, in_p)),         # X
            shared((in_p, hid_p)), shared((1, hid_p)),    # W1, b1
            shared((hid_p, hid_p)), shared((1, hid_p)),   # W2, b2
            shared((hid_p, mlp_p)), shared((1, mlp_p)),   # W3, b3
            shared((mlp_p, out_p)), shared((1, out_p)),   # W4, b4
        ],
        out_specs=batched((n, out_p)),
        compiler_params=pltpu.CompilerParams(
            dimension_semantics=("parallel",)),
    )(a, x_bf, w1, b1, w2, b2, w3, b3, w4, b4)

    return out[:, :, :out_dim]


# ---------------------------------------------------------------------------
# References
# ---------------------------------------------------------------------------
def _reference_forward_f32(x, edge_index, params):
    """Pure-f32 math matching the PyTorch module semantics."""
    def one(xg, eig):
        n = xg.shape[0]
        src, dst = eig[0], eig[1]
        a = jnp.zeros((n, n), jnp.float32).at[dst, src].add(1.0)
        a = a + jnp.eye(n, dtype=jnp.float32)
        deg = jnp.sum(a, axis=1)
        d = jnp.where(deg > 0.0, lax.rsqrt(deg), 0.0)
        a_hat = d[:, None] * a * d[None, :]
        h = a_hat @ (xg @ params["w1"]) + params["b1"]
        h = a_hat @ (h @ params["w2"]) + params["b2"]
        h = jnp.maximum(h, 0.0)
        h = h @ params["w3"] + params["b3"]
        h = jnp.maximum(h, 0.0)
        return h @ params["w4"] + params["b4"]
    return jax.vmap(one)(x, edge_index)


def _reference_forward_bf16(x, edge_index, params):
    """Mirrors the kernel's bf16-matmul / f32-epilogue structure exactly."""
    f32, bf16 = jnp.float32, jnp.bfloat16

    def dot(a, b):
        return jnp.dot(a.astype(bf16), b.astype(bf16), preferred_element_type=f32)

    def one(xg, eig):
        n = xg.shape[0]
        src, dst = eig[0], eig[1]
        a = jnp.eye(n, dtype=f32).at[dst, src].add(1.0)
        deg = jnp.sum(a, axis=1, keepdims=True)
        d = jnp.where(deg > 0.0, lax.rsqrt(deg), 0.0)

        def gcn(h, w, b):
            h = dot(h, w) * d
            return dot(a, h) * d + b

        h = gcn(xg, params["w1"], params["b1"])
        h = gcn(h, params["w2"], params["b2"])
        h = jnp.maximum(h, 0.0)
        h = dot(h, params["w3"]) + params["b3"]
        h = jnp.maximum(h, 0.0)
        return dot(h, params["w4"]) + params["b4"]
    return jax.vmap(one)(x, edge_index)


def _init_params(key, in_dim, hidden_dim, mlp_hidden, out_dim):
    keys = jax.random.split(key, 8)

    def lin(kw, kb, fan_in, fan_out):
        scale = 1.0 / np.sqrt(fan_in)
        w = jax.random.uniform(kw, (fan_in, fan_out), jnp.float32, -scale, scale)
        b = jax.random.uniform(kb, (1, fan_out), jnp.float32, -scale, scale)
        return w, b

    w1, b1 = lin(keys[0], keys[1], in_dim, hidden_dim)
    w2, b2 = lin(keys[2], keys[3], hidden_dim, hidden_dim)
    w3, b3 = lin(keys[4], keys[5], hidden_dim, mlp_hidden)
    w4, b4 = lin(keys[6], keys[7], mlp_hidden, out_dim)
    return dict(w1=w1, b1=b1, w2=w2, b2=b2, w3=w3, b3=b3, w4=w4, b4=b4)


if __name__ == "__main__":
    # Small shapes consistent with the module (module defaults: in=518,
    # hidden=128, mlp 64, out 4): a batch of 4 small graphs of 16 nodes each.
    B, N, IN_DIM, HIDDEN, MLP_HIDDEN, OUT_DIM = 4, 16, 70, 128, 64, 4
    E = 2 * N

    key = jax.random.PRNGKey(0)
    kx, kp = jax.random.split(key)

    x = jax.random.normal(kx, (B, N, IN_DIM), dtype=jnp.float32)

    # Deterministic, duplicate-free edges: per graph g, rings i -> i+1+g and
    # i -> i+8+g (mod N).
    idx = jnp.arange(N, dtype=jnp.int32)
    edge_list = []
    for g in range(B):
        src = jnp.concatenate([idx, idx])
        dst = jnp.concatenate([(idx + 1 + g) % N, (idx + 8 + g) % N])
        edge_list.append(jnp.stack([src, dst]).astype(jnp.int32))
    edge_index = jnp.stack(edge_list)                     # [B, 2, E]

    params = _init_params(kp, IN_DIM, HIDDEN, MLP_HIDDEN, OUT_DIM)

    out = gcn_classifier_forward(x, edge_index, params)
    out = jax.block_until_ready(out)
    assert out.shape == (B, N, OUT_DIM)

    # Tight check vs. a reference that mirrors the kernel's bf16/f32 structure.
    ref_bf16 = jax.block_until_ready(_reference_forward_bf16(x, edge_index, params))
    np.testing.assert_allclose(np.asarray(out), np.asarray(ref_bf16),
                               rtol=1e-2, atol=1e-2)

    # Looser check vs. the pure-f32 module semantics (bf16 MXU quantization).
    ref_f32 = jax.block_until_ready(_reference_forward_f32(x, edge_index, params))
    np.testing.assert_allclose(np.asarray(out), np.asarray(ref_f32),
                               rtol=5e-2, atol=5e-2)

    print("KERNEL_OK")
</pallas_src>

<mosaic_0001>
module attributes {stable_mosaic.version = 11 : i64} {
  func.func @_gcn_mlp_kernel(%arg0: i32, %arg1: memref<1x16x16xbf16, #tpu.memory_space<vmem>>, %arg2: memref<1x16x128xbf16, #tpu.memory_space<vmem>>, %arg3: memref<128x128xbf16, #tpu.memory_space<vmem>>, %arg4: memref<1x128xf32, #tpu.memory_space<vmem>>, %arg5: memref<128x128xbf16, #tpu.memory_space<vmem>>, %arg6: memref<1x128xf32, #tpu.memory_space<vmem>>, %arg7: memref<128x128xbf16, #tpu.memory_space<vmem>>, %arg8: memref<1x128xf32, #tpu.memory_space<vmem>>, %arg9: memref<128x128xbf16, #tpu.memory_space<vmem>>, %arg10: memref<1x128xf32, #tpu.memory_space<vmem>>, %arg11: memref<1x16x128xf32, #tpu.memory_space<vmem>>) attributes {dimension_semantics = [#tpu.dimension_semantics<parallel>], iteration_bounds = array<i64: 4>, scalar_prefetch = 0 : i64, scratch_operands = 0 : i64, tpu.core_type = #tpu.core_type<tc>, window_params = [{transform_indices = @transform_0, window_bounds = array<i64: 1, 16, 16>}, {transform_indices = @transform_1, window_bounds = array<i64: 1, 16, 128>}, {pipeline_mode = #tpu.pipeline_mode<synchronous>, transform_indices = @transform_2, window_bounds = array<i64: 128, 128>}, {pipeline_mode = #tpu.pipeline_mode<synchronous>, transform_indices = @transform_3, window_bounds = array<i64: 1, 128>}, {pipeline_mode = #tpu.pipeline_mode<synchronous>, transform_indices = @transform_4, window_bounds = array<i64: 128, 128>}, {pipeline_mode = #tpu.pipeline_mode<synchronous>, transform_indices = @transform_5, window_bounds = array<i64: 1, 128>}, {pipeline_mode = #tpu.pipeline_mode<synchronous>, transform_indices = @transform_6, window_bounds = array<i64: 128, 128>}, {pipeline_mode = #tpu.pipeline_mode<synchronous>, transform_indices = @transform_7, window_bounds = array<i64: 1, 128>}, {pipeline_mode = #tpu.pipeline_mode<synchronous>, transform_indices = @transform_8, window_bounds = array<i64: 128, 128>}, {pipeline_mode = #tpu.pipeline_mode<synchronous>, transform_indices = @transform_9, window_bounds = array<i64: 1, 128>}, {transform_indices = @transform_10, window_bounds = array<i64: 1, 16, 128>}]} {
    %c0 = arith.constant 0 : index
    %c0_0 = arith.constant 0 : index
    %c0_1 = arith.constant 0 : index
    %0 = vector.load %arg1[%c0, %c0_0, %c0_1] : memref<1x16x16xbf16, #tpu.memory_space<vmem>>, vector<1x16x16xbf16>
    %1 = vector.shape_cast %0 : vector<1x16x16xbf16> to vector<16x16xbf16>
    %2 = arith.extf %1 : vector<16x16xbf16> to vector<16x16xf32>
    %cst = arith.constant dense<0.000000e+00> : vector<16xf32>
    %3 = vector.multi_reduction <add>, %2, %cst [1] : vector<16x16xf32> to vector<16xf32>
    %4 = vector.shape_cast %3 : vector<16xf32> to vector<16x1xf32>
    %cst_2 = arith.constant 0.000000e+00 : f32
    %5 = vector.broadcast %cst_2 : f32 to vector<16x1xf32>
    %6 = arith.cmpf ogt, %4, %5 : vector<16x1xf32>
    %7 = math.rsqrt %4 : vector<16x1xf32>
    %cst_3 = arith.constant 0.000000e+00 : f32
    %8 = vector.broadcast %cst_3 : f32 to vector<16x1xf32>
    %9 = arith.select %6, %7, %8 : vector<16x1xi1>, vector<16x1xf32>
    %c0_4 = arith.constant 0 : index
    %c0_5 = arith.constant 0 : index
    %c0_6 = arith.constant 0 : index
    %10 = vector.load %arg2[%c0_4, %c0_5, %c0_6] : memref<1x16x128xbf16, #tpu.memory_space<vmem>>, vector<1x16x128xbf16>
    %11 = vector.shape_cast %10 : vector<1x16x128xbf16> to vector<16x128xbf16>
    %c0_7 = arith.constant 0 : index
    %c0_8 = arith.constant 0 : index
    %12 = vector.load %arg3[%c0_7, %c0_8] : memref<128x128xbf16, #tpu.memory_space<vmem>>, vector<128x128xbf16>
    %cst_9 = arith.constant dense<0.000000e+00> : vector<16x128xf32>
    %13 = tpu.matmul %11, %12, %cst_9 {dimension_numbers = #tpu.dot_dimension_numbers<[1], [0], [0], [1], [0, 0, 1, 1], [], []>} : vector<16x128xbf16>, vector<128x128xbf16>, vector<16x128xf32> -> vector<16x128xf32>
    %14 = vector.broadcast %9 : vector<16x1xf32> to vector<16x128xf32>
    %15 = arith.mulf %13, %14 : vector<16x128xf32>
    %16 = arith.truncf %15 : vector<16x128xf32> to vector<16x128xbf16>
    %cst_10 = arith.constant dense<0.000000e+00> : vector<16x128xf32>
    %17 = tpu.matmul %1, %16, %cst_10 {dimension_numbers = #tpu.dot_dimension_numbers<[1], [0], [0], [1], [0, 0, 1, 1], [], []>} : vector<16x16xbf16>, vector<16x128xbf16>, vector<16x128xf32> -> vector<16x128xf32>
    %18 = vector.broadcast %9 : vector<16x1xf32> to vector<16x128xf32>
    %19 = arith.mulf %17, %18 : vector<16x128xf32>
    %c0_11 = arith.constant 0 : index
    %c0_12 = arith.constant 0 : index
    %20 = vector.load %arg4[%c0_11, %c0_12] : memref<1x128xf32, #tpu.memory_space<vmem>>, vector<1x128xf32>
    %21 = vector.broadcast %20 : vector<1x128xf32> to vector<16x128xf32>
    %22 = arith.addf %19, %21 : vector<16x128xf32>
    %23 = arith.truncf %22 : vector<16x128xf32> to vector<16x128xbf16>
    %c0_13 = arith.constant 0 : index
    %c0_14 = arith.constant 0 : index
    %24 = vector.load %arg5[%c0_13, %c0_14] : memref<128x128xbf16, #tpu.memory_space<vmem>>, vector<128x128xbf16>
    %cst_15 = arith.constant dense<0.000000e+00> : vector<16x128xf32>
    %25 = tpu.matmul %23, %24, %cst_15 {dimension_numbers = #tpu.dot_dimension_numbers<[1], [0], [0], [1], [0, 0, 1, 1], [], []>} : vector<16x128xbf16>, vector<128x128xbf16>, vector<16x128xf32> -> vector<16x128xf32>
    %26 = vector.broadcast %9 : vector<16x1xf32> to vector<16x128xf32>
    %27 = arith.mulf %25, %26 : vector<16x128xf32>
    %28 = arith.truncf %27 : vector<16x128xf32> to vector<16x128xbf16>
    %cst_16 = arith.constant dense<0.000000e+00> : vector<16x128xf32>
    %29 = tpu.matmul %1, %28, %cst_16 {dimension_numbers = #tpu.dot_dimension_numbers<[1], [0], [0], [1], [0, 0, 1, 1], [], []>} : vector<16x16xbf16>, vector<16x128xbf16>, vector<16x128xf32> -> vector<16x128xf32>
    %30 = vector.broadcast %9 : vector<16x1xf32> to vector<16x128xf32>
    %31 = arith.mulf %29, %30 : vector<16x128xf32>
    %c0_17 = arith.constant 0 : index
    %c0_18 = arith.constant 0 : index
    %32 = vector.load %arg6[%c0_17, %c0_18] : memref<1x128xf32, #tpu.memory_space<vmem>>, vector<1x128xf32>
    %33 = vector.broadcast %32 : vector<1x128xf32> to vector<16x128xf32>
    %34 = arith.addf %31, %33 : vector<16x128xf32>
    %cst_19 = arith.constant 0.000000e+00 : f32
    %35 = vector.broadcast %cst_19 : f32 to vector<16x128xf32>
    %36 = arith.maximumf %34, %35 : vector<16x128xf32>
    %37 = arith.truncf %36 : vector<16x128xf32> to vector<16x128xbf16>
    %c0_20 = arith.constant 0 : index
    %c0_21 = arith.constant 0 : index
    %38 = vector.load %arg7[%c0_20, %c0_21] : memref<128x128xbf16, #tpu.memory_space<vmem>>, vector<128x128xbf16>
    %cst_22 = arith.constant dense<0.000000e+00> : vector<16x128xf32>
    %39 = tpu.matmul %37, %38, %cst_22 {dimension_numbers = #tpu.dot_dimension_numbers<[1], [0], [0], [1], [0, 0, 1, 1], [], []>} : vector<16x128xbf16>, vector<128x128xbf16>, vector<16x128xf32> -> vector<16x128xf32>
    %c0_23 = arith.constant 0 : index
    %c0_24 = arith.constant 0 : index
    %40 = vector.load %arg8[%c0_23, %c0_24] : memref<1x128xf32, #tpu.memory_space<vmem>>, vector<1x128xf32>
    %41 = vector.broadcast %40 : vector<1x128xf32> to vector<16x128xf32>
    %42 = arith.addf %39, %41 : vector<16x128xf32>
    %cst_25 = arith.constant 0.000000e+00 : f32
    %43 = vector.broadcast %cst_25 : f32 to vector<16x128xf32>
    %44 = arith.maximumf %42, %43 : vector<16x128xf32>
    %45 = arith.truncf %44 : vector<16x128xf32> to vector<16x128xbf16>
    %c0_26 = arith.constant 0 : index
    %c0_27 = arith.constant 0 : index
    %46 = vector.load %arg9[%c0_26, %c0_27] : memref<128x128xbf16, #tpu.memory_space<vmem>>, vector<128x128xbf16>
    %cst_28 = arith.constant dense<0.000000e+00> : vector<16x128xf32>
    %47 = tpu.matmul %45, %46, %cst_28 {dimension_numbers = #tpu.dot_dimension_numbers<[1], [0], [0], [1], [0, 0, 1, 1], [], []>} : vector<16x128xbf16>, vector<128x128xbf16>, vector<16x128xf32> -> vector<16x128xf32>
    %c0_29 = arith.constant 0 : index
    %c0_30 = arith.constant 0 : index
    %48 = vector.load %arg10[%c0_29, %c0_30] : memref<1x128xf32, #tpu.memory_space<vmem>>, vector<1x128xf32>
    %49 = vector.broadcast %48 : vector<1x128xf32> to vector<16x128xf32>
    %50 = arith.addf %47, %49 : vector<16x128xf32>
    %c0_31 = arith.constant 0 : index
    %c0_32 = arith.constant 0 : index
    %c0_33 = arith.constant 0 : index
    %51 = vector.load %arg11[%c0_31, %c0_32, %c0_33] : memref<1x16x128xf32, #tpu.memory_space<vmem>>, vector<1x16x128xf32>
    %52 = vector.shape_cast %51 : vector<1x16x128xf32> to vector<16x128xf32>
    %53 = vector.shape_cast %50 : vector<16x128xf32> to vector<1x16x128xf32>
    tpu.vector_store %arg11[%c0_31, %c0_32, %c0_33], %53 {strides = array<i32>} : memref<1x16x128xf32, #tpu.memory_space<vmem>>, vector<1x16x128xf32>,
    return
  }
  func.func @transform_0(%arg0: i32) -> (i32, i32, i32) {
    %c0_i32 = arith.constant 0 : i32
    %c0_i32_0 = arith.constant 0 : i32
    %c0_i32_1 = arith.constant 0 : i32
    return %arg0, %c0_i32, %c0_i32_0 : i32, i32, i32
  }
  func.func @transform_1(%arg0: i32) -> (i32, i32, i32) {
    %c0_i32 = arith.constant 0 : i32
    %c0_i32_0 = arith.constant 0 : i32
    %c0_i32_1 = arith.constant 0 : i32
    return %arg0, %c0_i32, %c0_i32_0 : i32, i32, i32
  }
  func.func @transform_2(%arg0: i32) -> (i32, i32) {
    %c0_i32 = arith.constant 0 : i32
    %c0_i32_0 = arith.constant 0 : i32
    %c0_i32_1 = arith.constant 0 : i32
    return %c0_i32, %c0_i32_0 : i32, i32
  }
  func.func @transform_3(%arg0: i32) -> (i32, i32) {
    %c0_i32 = arith.constant 0 : i32
    %c0_i32_0 = arith.constant 0 : i32
    %c0_i32_1 = arith.constant 0 : i32
    return %c0_i32, %c0_i32_0 : i32, i32
  }
  func.func @transform_4(%arg0: i32) -> (i32, i32) {
    %c0_i32 = arith.constant 0 : i32
    %c0_i32_0 = arith.constant 0 : i32
    %c0_i32_1 = arith.constant 0 : i32
    return %c0_i32, %c0_i32_0 : i32, i32
  }
  func.func @transform_5(%arg0: i32) -> (i32, i32) {
    %c0_i32 = arith.constant 0 : i32
    %c0_i32_0 = arith.constant 0 : i32
    %c0_i32_1 = arith.constant 0 : i32
    return %c0_i32, %c0_i32_0 : i32, i32
  }
  func.func @transform_6(%arg0: i32) -> (i32, i32) {
    %c0_i32 = arith.constant 0 : i32
    %c0_i32_0 = arith.constant 0 : i32
    %c0_i32_1 = arith.constant 0 : i32
    return %c0_i32, %c0_i32_0 : i32, i32
  }
  func.func @transform_7(%arg0: i32) -> (i32, i32) {
    %c0_i32 = arith.constant 0 : i32
    %c0_i32_0 = arith.constant 0 : i32
    %c0_i32_1 = arith.constant 0 : i32
    return %c0_i32, %c0_i32_0 : i32, i32
  }
  func.func @transform_8(%arg0: i32) -> (i32, i32) {
    %c0_i32 = arith.constant 0 : i32
    %c0_i32_0 = arith.constant 0 : i32
    %c0_i32_1 = arith.constant 0 : i32
    return %c0_i32, %c0_i32_0 : i32, i32
  }
  func.func @transform_9(%arg0: i32) -> (i32, i32) {
    %c0_i32 = arith.constant 0 : i32
    %c0_i32_0 = arith.constant 0 : i32
    %c0_i32_1 = arith.constant 0 : i32
    return %c0_i32, %c0_i32_0 : i32, i32
  }
  func.func @transform_10(%arg0: i32) -> (i32, i32, i32) {
    %c0_i32 = arith.constant 0 : i32
    %c0_i32_0 = arith.constant 0 : i32
    %c0_i32_1 = arith.constant 0 : i32
    return %arg0, %c0_i32, %c0_i32_0 : i32, i32, i32
  }
}

</mosaic_0001>

<llo_original>
// kernel: tpu_custom_call.1
$region0: #{tpu_custom_call.1}
  #allocation0 [shape = 'u32[]', space=smem, size = 0x4, offset = 0x4, fixed_abs, tag = 'smem constant byte address 0x4 - core index']
  #allocation1 [shape = 'u32[144,128]{1,0:T(1,128)}', space=vmem, size = 0x12000, scoped, tag = 'internal scratch']
  %s0 = inlined_call_operand.hbm [shape: bf16[4,16,16], index: 0, kind: input, shape index: {}]
  %s1 = inlined_call_operand.hbm [shape: bf16[4,16,128], index: 1, kind: input, shape index: {}]
  %s2 = inlined_call_operand.hbm [shape: bf16[128,128], index: 2, kind: input, shape index: {}]
  %s3 = inlined_call_operand.vmem [shape: f32[1,128], index: 3, kind: input, shape index: {}]
  %s4 = inlined_call_operand.hbm [shape: bf16[128,128], index: 4, kind: input, shape index: {}]
  %s5 = inlined_call_operand.vmem [shape: f32[1,128], index: 5, kind: input, shape index: {}]
  %s6 = inlined_call_operand.hbm [shape: bf16[128,128], index: 6, kind: input, shape index: {}]
  %s7 = inlined_call_operand.vmem [shape: f32[1,128], index: 7, kind: input, shape index: {}]
  %s8 = inlined_call_operand.hbm [shape: bf16[128,128], index: 8, kind: input, shape index: {}]
  %s9 = inlined_call_operand.vmem [shape: f32[1,128], index: 9, kind: input, shape index: {}]
  %s10 = inlined_call_operand.hbm [shape: f32[4,16,128], index: 10, kind: output, shape index: {}]
  %s11 = sld [smem:[#allocation0]]
  $region97: #{tpu_custom_call.1} parent=0
    _
  %s13 = ssub.s32 1, %s11
  %s14 = scalar_select 0, %s13, %s11
  $region1: #{tpu_custom_call.1} parent=0
    #allocation2 [shape = 'u8[8192]{0}', space=vmem, size = 0x2000, scoped, tag = 'input window, operand 0']
    #allocation3 [shape = 's32[2]{0}', space=sflag, size = 0x8, scoped, tag = 'scoped memory for tpu_custom_call.1']
    #allocation4 [shape = 's32[2]{0}', space=sflag, size = 0x8, scoped, tag = 'scoped memory for tpu_custom_call.1']
    #allocation5 [shape = 'u8[8192]{0}', space=vmem, size = 0x2000, scoped, tag = 'input window, operand 1']
    #allocation6 [shape = 's32[2]{0}', space=sflag, size = 0x8, scoped, tag = 'scoped memory for tpu_custom_call.1']
    #allocation7 [shape = 'u8[32768]{0}', space=vmem, size = 0x8000, scoped, tag = 'input window, operand 2, single buffered']
    #allocation8 [shape = 'u8[32768]{0}', space=vmem, size = 0x8000, scoped, tag = 'input window, operand 4, single buffered']
    #allocation9 [shape = 's32[1]{0}', space=sflag, size = 0x4, scoped, tag = 'scoped memory for tpu_custom_call.1']
    #allocation10 [shape = 'u8[32768]{0}', space=vmem, size = 0x8000, scoped, tag = 'input window, operand 6, single buffered']
    #allocation11 [shape = 'u8[32768]{0}', space=vmem, size = 0x8000, scoped, tag = 'input window, operand 8, single buffered']
    #allocation12 [shape = 's32[1]{0}', space=sflag, size = 0x4, scoped, tag = 'scoped memory for tpu_custom_call.1']
    #allocation13 [shape = 'u8[16384]{0}', space=vmem, size = 0x4000, scoped, tag = 'output window, operand 0']
    %15 = vsyncpa [#allocation3], 0
    %s16 = scalar_lea.sflag [#allocation3], 1
    %17 = vsyncpa %s16, 0
    %18 = vsyncpa [#allocation6], 0
    %s19 = scalar_lea.sflag [#allocation6], 1
    %20 = vsyncpa %s19, 0
    %21 = vsyncpa [#allocation9], 0
    %22 = vsyncpa [#allocation12], 0
    %23 = vsyncpa [#allocation4], 0
    %s24 = scalar_lea.sflag [#allocation4], 1
    %25 = vsyncpa %s24, 0
    loop: start=0, step=1, limit=6
    $region2: #{tpu_custom_call.1} parent=1 // loop_pre_header
      _
    $region3: #{tpu_custom_call.1} parent=1 // loop_header
      %s27 = sphi 0, %s31
      %p28 = scmp.ge.s32.totalorder %s27, 6
      %s37 = sphi 0, %s39
      %s40 = sphi 0, %s37
      %s41 = sphi 0, %s40
      %s57 = sphi 0, %s41
      %s63 = sphi 0, %s65
      %s66 = sphi 0, %s63
      %s67 = sphi 0, %s66
      %s83 = sphi 0, %s67
      %s87 = sphi 0, %s87
      %s89 = sphi 0, %s87
      %s90 = sphi 0, %s89
      %s104 = sphi 0, %s90
      %s108 = sphi 0, %s108
      %s110 = sphi 0, %s108
      %s111 = sphi 0, %s110
      %s125 = sphi 0, %s111
      %s129 = sphi 0, %s129
      %s131 = sphi 0, %s129
      %s132 = sphi 0, %s131
      %s146 = sphi 0, %s132
      %s150 = sphi 0, %s150
      %s152 = sphi 0, %s150
      %s153 = sphi 0, %s152
      %s167 = sphi 0, %s153
      %s171 = sphi 0, %s171
      %s173 = sphi 0, %s171
      %s174 = sphi 0, %s173
      %s188 = sphi 0, %s174
      %s192 = sphi 0, %s192
      %s194 = sphi 0, %s192
      %s195 = sphi 0, %s194
      %s209 = sphi 0, %s195
      %s213 = sphi 0, %s213
      %s215 = sphi 0, %s213
      %s216 = sphi 0, %s215
      %s230 = sphi 0, %s216
      %s234 = sphi 0, %s234
      %s236 = sphi 0, %s234
      %s237 = sphi 0, %s236
      %s251 = sphi 0, %s237
      %s257 = sphi 0, %s259
      %s260 = sphi 0, %s257
      %s261 = sphi 0, %s260
      %s277 = sphi 0, %s261
    $region4: #{tpu_custom_call.1} parent=1 // loop_header_branch
      %30 = sbr.rel (%p28) target = $region8
    $region5: #{tpu_custom_call.1} parent=1 // loop_body
      %s32 = ssub.s32 %s27, 1
      %s33 = ssub.s32 %s27, 2
      %s34 = sadd.s32 %s27, 1
      %s35 = ssub.s32 %s27, %s34
      %p36 = scmp.eq.s32.totalorder %s35, 0
      %s38 = sadd.s32 %s37, 1
      %s39 = scalar_select %p36, %s37, %s38
      %p42 = pneg %p36
      %p43 = scmp.eq.s32.totalorder %s27, 3
      %p44 = por %p42, %p43
      %p45 = scmp.ne.s32.totalorder %s37, %s40
      %p46 = scmp.eq.s32.totalorder %s27, 0
      %p47 = por %p45, %p46
      %p48 = scmp.ne.s32.totalorder %s37, %s40
      %p49 = scmp.eq.s32.totalorder %s32, 3
      %p50 = por %p48, %p49
      %p51 = scmp.ne.s32.totalorder %s40, %s41
      %p52 = scmp.eq.s32.totalorder %s32, 0
      %p53 = por %p51, %p52
      %p54 = scmp.ne.s32.totalorder %s40, %s41
      %p55 = scmp.eq.s32.totalorder %s33, 3
      %p56 = por %p54, %p55
      %p58 = scmp.ne.s32.totalorder %s41, %s57
      %p59 = scmp.eq.s32.totalorder %s33, 0
      %p60 = por %p58, %p59
      %s61 = ssub.s32 %s27, %s34
      %p62 = scmp.eq.s32.totalorder %s61, 0
      %s64 = sadd.s32 %s63, 1
      %s65 = scalar_select %p62, %s63, %s64
      %p68 = pneg %p62
      %p69 = scmp.eq.s32.totalorder %s27, 3
      %p70 = por %p68, %p69
      %p71 = scmp.ne.s32.totalorder %s63, %s66
      %p72 = scmp.eq.s32.totalorder %s27, 0
      %p73 = por %p71, %p72
      %p74 = scmp.ne.s32.totalorder %s63, %s66
      %p75 = scmp.eq.s32.totalorder %s32, 3
      %p76 = por %p74, %p75
      %p77 = scmp.ne.s32.totalorder %s66, %s67
      %p78 = scmp.eq.s32.totalorder %s32, 0
      %p79 = por %p77, %p78
      %p80 = scmp.ne.s32.totalorder %s66, %s67
      %p81 = scmp.eq.s32.totalorder %s33, 3
      %p82 = por %p80, %p81
      %p84 = scmp.ne.s32.totalorder %s67, %s83
      %p85 = scmp.eq.s32.totalorder %s33, 0
      %p86 = por %p84, %p85
      %s88 = sadd.s32 %s87, 1
      %p91 = scmp.eq.s32.totalorder %s27, 3
      %p92 = scmp.ne.s32.totalorder %s87, %s89
      %p93 = scmp.eq.s32.totalorder %s27, 0
      %p94 = por %p92, %p93
      %p95 = scmp.ne.s32.totalorder %s87, %s89
      %p96 = scmp.eq.s32.totalorder %s32, 3
      %p97 = por %p95, %p96
      %p98 = scmp.ne.s32.totalorder %s89, %s90
      %p99 = scmp.eq.s32.totalorder %s32, 0
      %p100 = por %p98, %p99
      %p101 = scmp.ne.s32.totalorder %s89, %s90
      %p102 = scmp.eq.s32.totalorder %s33, 3
      %p103 = por %p101, %p102
      %p105 = scmp.ne.s32.totalorder %s90, %s104
      %p106 = scmp.eq.s32.totalorder %s33, 0
      %p107 = por %p105, %p106
      %s109 = sadd.s32 %s108, 1
      %p112 = scmp.eq.s32.totalorder %s27, 3
      %p113 = scmp.ne.s32.totalorder %s108, %s110
      %p114 = scmp.eq.s32.totalorder %s27, 0
      %p115 = por %p113, %p114
      %p116 = scmp.ne.s32.totalorder %s108, %s110
      %p117 = scmp.eq.s32.totalorder %s32, 3
      %p118 = por %p116, %p117
      %p119 = scmp.ne.s32.totalorder %s110, %s111
      %p120 = scmp.eq.s32.totalorder %s32, 0
      %p121 = por %p119, %p120
      %p122 = scmp.ne.s32.totalorder %s110, %s111
      %p123 = scmp.eq.s32.totalorder %s33, 3
      %p124 = por %p122, %p123
      %p126 = scmp.ne.s32.totalorder %s111, %s125
      %p127 = scmp.eq.s32.totalorder %s33, 0
      %p128 = por %p126, %p127
      %s130 = sadd.s32 %s129, 1
      %p133 = scmp.eq.s32.totalorder %s27, 3
      %p134 = scmp.ne.s32.totalorder %s129, %s131
      %p135 = scmp.eq.s32.totalorder %s27, 0
      %p136 = por %p134, %p135
      %p137 = scmp.ne.s32.totalorder %s129, %s131
      %p138 = scmp.eq.s32.totalorder %s32, 3
      %p139 = por %p137, %p138
      %p140 = scmp.ne.s32.totalorder %s131, %s132
      %p141 = scmp.eq.s32.totalorder %s32, 0
      %p142 = por %p140, %p141
      %p143 = scmp.ne.s32.totalorder %s131, %s132
      %p144 = scmp.eq.s32.totalorder %s33, 3
      %p145 = por %p143, %p144
      %p147 = scmp.ne.s32.totalorder %s132, %s146
      %p148 = scmp.eq.s32.totalorder %s33, 0
      %p149 = por %p147, %p148
      %s151 = sadd.s32 %s150, 1
      %p154 = scmp.eq.s32.totalorder %s27, 3
      %p155 = scmp.ne.s32.totalorder %s150, %s152
      %p156 = scmp.eq.s32.totalorder %s27, 0
      %p157 = por %p155, %p156
      %p158 = scmp.ne.s32.totalorder %s150, %s152
      %p159 = scmp.eq.s32.totalorder %s32, 3
      %p160 = por %p158, %p159
      %p161 = scmp.ne.s32.totalorder %s152, %s153
      %p162 = scmp.eq.s32.totalorder %s32, 0
      %p163 = por %p161, %p162
      %p164 = scmp.ne.s32.totalorder %s152, %s153
      %p165 = scmp.eq.s32.totalorder %s33, 3
      %p166 = por %p164, %p165
      %p168 = scmp.ne.s32.totalorder %s153, %s167
      %p169 = scmp.eq.s32.totalorder %s33, 0
      %p170 = por %p168, %p169
      %s172 = sadd.s32 %s171, 1
      %p175 = scmp.eq.s32.totalorder %s27, 3
      %p176 = scmp.ne.s32.totalorder %s171, %s173
      %p177 = scmp.eq.s32.totalorder %s27, 0
      %p178 = por %p176, %p177
      %p179 = scmp.ne.s32.totalorder %s171, %s173
      %p180 = scmp.eq.s32.totalorder %s32, 3
      %p181 = por %p179, %p180
      %p182 = scmp.ne.s32.totalorder %s173, %s174
      %p183 = scmp.eq.s32.totalorder %s32, 0
      %p184 = por %p182, %p183
      %p185 = scmp.ne.s32.totalorder %s173, %s174
      %p186 = scmp.eq.s32.totalorder %s33, 3
      %p187 = por %p185, %p186
      %p189 = scmp.ne.s32.totalorder %s174, %s188
      %p190 = scmp.eq.s32.totalorder %s33, 0
      %p191 = por %p189, %p190
      %s193 = sadd.s32 %s192, 1
      %p196 = scmp.eq.s32.totalorder %s27, 3
      %p197 = scmp.ne.s32.totalorder %s192, %s194
      %p198 = scmp.eq.s32.totalorder %s27, 0
      %p199 = por %p197, %p198
      %p200 = scmp.ne.s32.totalorder %s192, %s194
      %p201 = scmp.eq.s32.totalorder %s32, 3
      %p202 = por %p200, %p201
      %p203 = scmp.ne.s32.totalorder %s194, %s195
      %p204 = scmp.eq.s32.totalorder %s32, 0
      %p205 = por %p203, %p204
      %p206 = scmp.ne.s32.totalorder %s194, %s195
      %p207 = scmp.eq.s32.totalorder %s33, 3
      %p208 = por %p206, %p207
      %p210 = scmp.ne.s32.totalorder %s195, %s209
      %p211 = scmp.eq.s32.totalorder %s33, 0
      %p212 = por %p210, %p211
      %s214 = sadd.s32 %s213, 1
      %p217 = scmp.eq.s32.totalorder %s27, 3
      %p218 = scmp.ne.s32.totalorder %s213, %s215
      %p219 = scmp.eq.s32.totalorder %s27, 0
      %p220 = por %p218, %p219
      %p221 = scmp.ne.s32.totalorder %s213, %s215
      %p222 = scmp.eq.s32.totalorder %s32, 3
      %p223 = por %p221, %p222
      %p224 = scmp.ne.s32.totalorder %s215, %s216
      %p225 = scmp.eq.s32.totalorder %s32, 0
      %p226 = por %p224, %p225
      %p227 = scmp.ne.s32.totalorder %s215, %s216
      %p228 = scmp.eq.s32.totalorder %s33, 3
      %p229 = por %p227, %p228
      %p231 = scmp.ne.s32.totalorder %s216, %s230
      %p232 = scmp.eq.s32.totalorder %s33, 0
      %p233 = por %p231, %p232
      %s235 = sadd.s32 %s234, 1
      %p238 = scmp.eq.s32.totalorder %s27, 3
      %p239 = scmp.ne.s32.totalorder %s234, %s236
      %p240 = scmp.eq.s32.totalorder %s27, 0
      %p241 = por %p239, %p240
      %p242 = scmp.ne.s32.totalorder %s234, %s236
      %p243 = scmp.eq.s32.totalorder %s32, 3
      %p244 = por %p242, %p243
      %p245 = scmp.ne.s32.totalorder %s236, %s237
      %p246 = scmp.eq.s32.totalorder %s32, 0
      %p247 = por %p245, %p246
      %p248 = scmp.ne.s32.totalorder %s236, %s237
      %p249 = scmp.eq.s32.totalorder %s33, 3
      %p250 = por %p248, %p249
      %p252 = scmp.ne.s32.totalorder %s237, %s251
      %p253 = scmp.eq.s32.totalorder %s33, 0
      %p254 = por %p252, %p253
      %s255 = ssub.s32 %s27, %s34
      %p256 = scmp.eq.s32.totalorder %s255, 0
      %s258 = sadd.s32 %s257, 1
      %s259 = scalar_select %p256, %s257, %s258
      %p262 = pneg %p256
      %p263 = scmp.eq.s32.totalorder %s27, 3
      %p264 = por %p262, %p263
      %p265 = scmp.ne.s32.totalorder %s257, %s260
      %p266 = scmp.eq.s32.totalorder %s27, 0
      %p267 = por %p265, %p266
      %p268 = scmp.ne.s32.totalorder %s257, %s260
      %p269 = scmp.eq.s32.totalorder %s32, 3
      %p270 = por %p268, %p269
      %p271 = scmp.ne.s32.totalorder %s260, %s261
      %p272 = scmp.eq.s32.totalorder %s32, 0
      %p273 = por %p271, %p272
      %p274 = scmp.ne.s32.totalorder %s260, %s261
      %p275 = scmp.eq.s32.totalorder %s33, 3
      %p276 = por %p274, %p275
      %p278 = scmp.ne.s32.totalorder %s261, %s277
      %p279 = scmp.eq.s32.totalorder %s33, 0
      %p280 = por %p278, %p279
      %p281 = scmp.le.s32.totalorder 1, %s27
      %p282 = scmp.lt.s32.totalorder %s27, 5
      %p283 = pnand %p281, %p282
      %p284 = pneg %p283
      // Predicated region
      $region9: #{tpu_custom_call.1} parent=5 // pred_check
        _
      $region10: #{tpu_custom_call.1} parent=5 // pred_check_branch
        %286 = sbr.rel (%p283) target = $region12
      $region11: #{tpu_custom_call.1} parent=5 // pred_region
        %s287 = ssub.s32 %s27, 1
        // Predicated region
        $region13: #{tpu_custom_call.1} parent=11 // pred_check
          %p288 = pneg %p100
        $region14: #{tpu_custom_call.1} parent=11 // pred_check_branch
          %290 = sbr.rel (%p288) target = $region16
        $region15: #{tpu_custom_call.1} parent=11 // pred_region
          %s292 = ssub.s32 1024, 1024
          %293 = vsyncadd [#allocation6], %s292
          %s294 = sshll.u32 [#allocation7], 4
          %s295 = int_to_ptr.vmem [resolvable:$true] %s294
          %300 = dma.hbm_to_vmem [thread:$0]  %s2, 1024, %s295, [#allocation6], 64, 64, 4
        $region16: #{tpu_custom_call.1} parent=11 // pred_fallthru
          _
        // Predicated region
        $region17: #{tpu_custom_call.1} parent=11 // pred_check
          %p301 = pneg %p121
        $region18: #{tpu_custom_call.1} parent=11 // pred_check_branch
          %303 = sbr.rel (%p301) target = $region20
        $region19: #{tpu_custom_call.1} parent=11 // pred_region
          _
        $region20: #{tpu_custom_call.1} parent=11 // pred_fallthru
          _
        // Predicated region
        $region21: #{tpu_custom_call.1} parent=11 // pred_check
          %p304 = pneg %p142
        $region22: #{tpu_custom_call.1} parent=11 // pred_check_branch
          %306 = sbr.rel (%p304) target = $region24
        $region23: #{tpu_custom_call.1} parent=11 // pred_region
          %s308 = ssub.s32 1024, 1024
          %309 = vsyncadd [#allocation9], %s308
          %s310 = sshll.u32 [#allocation8], 4
          %s311 = int_to_ptr.vmem [resolvable:$true] %s310
          %316 = dma.hbm_to_vmem [thread:$0]  %s4, 1024, %s311, [#allocation9], 64, 64, 4
        $region24: #{tpu_custom_call.1} parent=11 // pred_fallthru
          _
        // Predicated region
        $region25: #{tpu_custom_call.1} parent=11 // pred_check
          %p317 = pneg %p163
        $region26: #{tpu_custom_call.1} parent=11 // pred_check_branch
          %319 = sbr.rel (%p317) target = $region28
        $region27: #{tpu_custom_call.1} parent=11 // pred_region
          _
        $region28: #{tpu_custom_call.1} parent=11 // pred_fallthru
          _
        // Predicated region
        $region29: #{tpu_custom_call.1} parent=11 // pred_check
          %p320 = pneg %p184
        $region30: #{tpu_custom_call.1} parent=11 // pred_check_branch
          %322 = sbr.rel (%p320) target = $region32
        $region31: #{tpu_custom_call.1} parent=11 // pred_region
          %s324 = ssub.s32 1024, 1024
          %325 = vsyncadd [#allocation9], %s324
          %s326 = sshll.u32 [#allocation10], 4
          %s327 = int_to_ptr.vmem [resolvable:$true] %s326
          %332 = dma.hbm_to_vmem [thread:$0]  %s6, 1024, %s327, [#allocation9], 64, 64, 4
        $region32: #{tpu_custom_call.1} parent=11 // pred_fallthru
          _
        // Predicated region
        $region33: #{tpu_custom_call.1} parent=11 // pred_check
          %p333 = pneg %p205
        $region34: #{tpu_custom_call.1} parent=11 // pred_check_branch
          %335 = sbr.rel (%p333) target = $region36
        $region35: #{tpu_custom_call.1} parent=11 // pred_region
          _
        $region36: #{tpu_custom_call.1} parent=11 // pred_fallthru
          _
        // Predicated region
        $region37: #{tpu_custom_call.1} parent=11 // pred_check
          %p336 = pneg %p226
        $region38: #{tpu_custom_call.1} parent=11 // pred_check_branch
          %338 = sbr.rel (%p336) target = $region40
        $region39: #{tpu_custom_call.1} parent=11 // pred_region
          %s340 = ssub.s32 1024, 1024
          %341 = vsyncadd [#allocation12], %s340
          %s342 = sshll.u32 [#allocation11], 4
          %s343 = int_to_ptr.vmem [resolvable:$true] %s342
          %348 = dma.hbm_to_vmem [thread:$0]  %s8, 1024, %s343, [#allocation12], 64, 64, 4
        $region40: #{tpu_custom_call.1} parent=11 // pred_fallthru
          _
        // Predicated region
        $region41: #{tpu_custom_call.1} parent=11 // pred_check
          %p349 = pneg %p247
        $region42: #{tpu_custom_call.1} parent=11 // pred_check_branch
          %351 = sbr.rel (%p349) target = $region44
        $region43: #{tpu_custom_call.1} parent=11 // pred_region
          _
        $region44: #{tpu_custom_call.1} parent=11 // pred_fallthru
          _
      $region12: #{tpu_custom_call.1} parent=5 // pred_fallthru
        _
      %p352 = scmp.lt.s32.totalorder %s27, 4
      // Predicated region
      $region45: #{tpu_custom_call.1} parent=5 // pred_check
        %p353 = pneg %p352
      $region46: #{tpu_custom_call.1} parent=5 // pred_check_branch
        %355 = sbr.rel (%p353) target = $region48
      $region47: #{tpu_custom_call.1} parent=5 // pred_region
        // Predicated region
        $region49: #{tpu_custom_call.1} parent=47 // pred_check
          %p356 = pneg %p47
        $region50: #{tpu_custom_call.1} parent=47 // pred_check_branch
          %358 = sbr.rel (%p356) target = $region52
        $region51: #{tpu_custom_call.1} parent=47 // pred_region
          %s359 = sand.u32 %s37, 1
          %s360 = scalar_lea.sflag [#allocation3], %s359
          %s361 = sand.u32 %s37, 1
          %s362 = smul.addr %s361, 8
          %s363 = scalar_lea.vmem [#allocation2], %s362
          %s365 = ssub.s32 128, 128
          %366 = vsyncadd %s360, %s365
          %s367 = smul.addr %s27, 2
          %s368 = smul.addr %s367, 64
          %s369 = scalar_lea.hbm %s0, %s368
          %s370 = sshll.u32 %s363, 4
          %s371 = int_to_ptr.vmem [resolvable:$true] %s370
          %376 = dma.hbm_to_vmem [thread:$0]  %s369, 128, %s371, %s360, 64, 64, 4
        $region52: #{tpu_custom_call.1} parent=47 // pred_fallthru
          _
        // Predicated region
        $region53: #{tpu_custom_call.1} parent=47 // pred_check
          %p377 = pneg %p73
        $region54: #{tpu_custom_call.1} parent=47 // pred_check_branch
          %379 = sbr.rel (%p377) target = $region56
        $region55: #{tpu_custom_call.1} parent=47 // pred_region
          %s380 = sand.u32 %s27, 1
          %s381 = scalar_lea.sflag [#allocation6], %s380
          %s382 = sand.u32 %s63, 1
          %s383 = smul.addr %s382, 8
          %s384 = scalar_lea.vmem [#allocation5], %s383
          %s386 = ssub.s32 128, 128
          %387 = vsyncadd %s381, %s386
          %s388 = smul.addr %s27, 2
          %s389 = smul.addr %s388, 64
          %s390 = scalar_lea.hbm %s1, %s389
          %s391 = sshll.u32 %s384, 4
          %s392 = int_to_ptr.vmem [resolvable:$true] %s391
          %397 = dma.hbm_to_vmem [thread:$0]  %s390, 128, %s392, %s381, 64, 64, 4
        $region56: #{tpu_custom_call.1} parent=47 // pred_fallthru
          _
      $region48: #{tpu_custom_call.1} parent=5 // pred_fallthru
        _
      %p398 = scmp.le.s32.totalorder 1, %s27
      %p399 = scmp.lt.s32.totalorder %s27, 5
      %p400 = pnand %p398, %p399
      %p401 = pneg %p400
      // Predicated region
      $region57: #{tpu_custom_call.1} parent=5 // pred_check
        _
      $region58: #{tpu_custom_call.1} parent=5 // pred_check_branch
        %403 = sbr.rel (%p400) target = $region60
      $region59: #{tpu_custom_call.1} parent=5 // pred_region
        %s404 = ssub.s32 %s27, 1
        %s405 = sand.u32 %s40, 1
        %s406 = scalar_lea.sflag [#allocation3], %s405
        %s407 = sand.u32 %s40, 1
        %s408 = smul.addr %s407, 8
        %s409 = scalar_lea.vmem [#allocation2], %s408
        // Predicated region
        $region61: #{tpu_custom_call.1} parent=59 // pred_check
          %p410 = pneg %p53
        $region62: #{tpu_custom_call.1} parent=59 // pred_check_branch
          %412 = sbr.rel (%p410) target = $region64
        $region63: #{tpu_custom_call.1} parent=59 // pred_region
          %413 = dma.done %s406, 128
        $region64: #{tpu_custom_call.1} parent=59 // pred_fallthru
          _
        %s414 = sand.u32 %s32, 1
        %s415 = scalar_lea.sflag [#allocation6], %s414
        %s416 = sand.u32 %s66, 1
        %s417 = smul.addr %s416, 8
        %s418 = scalar_lea.vmem [#allocation5], %s417
        // Predicated region
        $region65: #{tpu_custom_call.1} parent=59 // pred_check
          %p419 = pneg %p79
        $region66: #{tpu_custom_call.1} parent=59 // pred_check_branch
          %421 = sbr.rel (%p419) target = $region68
        $region67: #{tpu_custom_call.1} parent=59 // pred_region
          %422 = dma.done %s415, 128
        $region68: #{tpu_custom_call.1} parent=59 // pred_fallthru
          _
        // Predicated region
        $region69: #{tpu_custom_call.1} parent=59 // pred_check
          %p423 = pneg %p100
        $region70: #{tpu_custom_call.1} parent=59 // pred_check_branch
          %425 = sbr.rel (%p423) target = $region72
        $region71: #{tpu_custom_call.1} parent=59 // pred_region
          %426 = dma.done [#allocation6], 1024
        $region72: #{tpu_custom_call.1} parent=59 // pred_fallthru
          _
        // Predicated region
        $region73: #{tpu_custom_call.1} parent=59 // pred_check
          %p427 = pneg %p142
        $region74: #{tpu_custom_call.1} parent=59 // pred_check_branch
          %429 = sbr.rel (%p427) target = $region76
        $region75: #{tpu_custom_call.1} parent=59 // pred_region
          %430 = dma.done [#allocation9], 1024
        $region76: #{tpu_custom_call.1} parent=59 // pred_fallthru
          _
        // Predicated region
        $region77: #{tpu_custom_call.1} parent=59 // pred_check
          %p431 = pneg %p184
        $region78: #{tpu_custom_call.1} parent=59 // pred_check_branch
          %433 = sbr.rel (%p431) target = $region80
        $region79: #{tpu_custom_call.1} parent=59 // pred_region
          %434 = dma.done [#allocation9], 1024
        $region80: #{tpu_custom_call.1} parent=59 // pred_fallthru
          _
        // Predicated region
        $region81: #{tpu_custom_call.1} parent=59 // pred_check
          %p435 = pneg %p226
        $region82: #{tpu_custom_call.1} parent=59 // pred_check_branch
          %437 = sbr.rel (%p435) target = $region84
        $region83: #{tpu_custom_call.1} parent=59 // pred_region
          %438 = dma.done [#allocation12], 1024
        $region84: #{tpu_custom_call.1} parent=59 // pred_fallthru
          _
        %s439 = sand.u32 %s40, 1
        %s440 = scalar_lea.sflag [#allocation3], %s439
        %s441 = sand.u32 %s40, 1
        %s442 = smul.addr %s441, 8
        %s443 = scalar_lea.vmem [#allocation2], %s442
        %p444 = pneg %p53
        %p445 = pneg %p50
        %s446 = sand.u32 %s32, 1
        %s447 = scalar_lea.sflag [#allocation6], %s446
        %s448 = sand.u32 %s66, 1
        %s449 = smul.addr %s448, 8
        %s450 = scalar_lea.vmem [#allocation5], %s449
        %p451 = pneg %p79
        %p452 = pneg %p76
        %p453 = pneg %p100
        %p454 = pneg %p97
        %p455 = pneg %p121
        %p456 = pneg %p118
        %p457 = pneg %p142
        %p458 = pneg %p139
        %p459 = pneg %p163
        %p460 = pneg %p160
        %p461 = pneg %p184
        %p462 = pneg %p181
        %p463 = pneg %p205
        %p464 = pneg %p202
        %p465 = pneg %p226
        %p466 = pneg %p223
        %p467 = pneg %p247
        %p468 = pneg %p244
        %p469 = pneg %p273
        %p470 = pneg %p270
        %s471 = sand.u32 %s260, 1
        %s472 = scalar_lea.sflag [#allocation4], %s471
        %s473 = sand.u32 %s260, 1
        %s474 = smul.addr %s473, 16
        %s475 = scalar_lea.vmem [#allocation13], %s474
        %v477 = vld [vmem:[%s409] sm:$0xf]
        %v478 = vld [vmem:[%s409 + $0x4] sm:$0xf]
        %v479 = vunpack.c.l.bf16 %v477
        %v480 = vunpack.c.l.bf16 %v478
        %vm481 = vcmask 130048
        %v482 = vsel %vm481, %v479, 0.0
        %483 = vadd.xlane.f32.xlu0 %v482
        %v484 = vpop.xlane.xlu0 %483
        %v485 = vsel %vm481, %v480, 0.0
        %486 = vadd.xlane.f32.xlu0 %v485
        %v487 = vpop.xlane.xlu0 %486
        %vm488 = vcmp.gt.f32.partialorder %v484, 0.0
        %vm489 = vcmp.gt.f32.partialorder %v487, 0.0
        %v490 = vrsqrt.pop %v484
        %v491 = vrsqrt.pop %v487
        %v492 = vsel %vm488, %v490, 0.0
        %v493 = vsel %vm489, %v491, 0.0
        %v494 = vld [vmem:[%s418] sm:$0xf]
        %v495 = vld [vmem:[%s418 + $0x4] sm:$0xf]
        %v496 = vld [vmem:[#allocation7] sm:$0xf]
        %v497 = vld [vmem:[#allocation7 + $0x4] sm:$0xf]
        %v498 = vld [vmem:[#allocation7 + $0x8] sm:$0xf]
        %v499 = vld [vmem:[#allocation7 + $0xc] sm:$0xf]
        %v500 = vld [vmem:[#allocation7 + $0x10] sm:$0xf]
        %v501 = vld [vmem:[#allocation7 + $0x14] sm:$0xf]
        %v502 = vld [vmem:[#allocation7 + $0x18] sm:$0xf]
        %v503 = vld [vmem:[#allocation7 + $0x1c] sm:$0xf]
        %v504 = vld [vmem:[#allocation7 + $0x20] sm:$0xf]
        %v505 = vld [vmem:[#allocation7 + $0x24] sm:$0xf]
        %v506 = vld [vmem:[#allocation7 + $0x28] sm:$0xf]
        %v507 = vld [vmem:[#allocation7 + $0x2c] sm:$0xf]
        %v508 = vld [vmem:[#allocation7 + $0x30] sm:$0xf]
        %v509 = vld [vmem:[#allocation7 + $0x34] sm:$0xf]
        %v510 = vld [vmem:[#allocation7 + $0x38] sm:$0xf]
        %v511 = vld [vmem:[#allocation7 + $0x3c] sm:$0xf]
        %v514 = vunpack.c.l.b16 %v494
        %v515 = vunpack.c.l.b16 %v495
        %v516 = vpack.c.b16 %v515, %v514
        %v534 = vunpack.c.l.b16 %v496
        %v535 = vunpack.c.l.b16 %v497
        %v536 = vunpack.c.l.b16 %v498
        %v537 = vunpack.c.l.b16 %v499
        %v538 = vunpack.c.l.b16 %v500
        %v539 = vunpack.c.l.b16 %v501
        %v540 = vunpack.c.l.b16 %v502
        %v541 = vunpack.c.l.b16 %v503
        %v542 = vunpack.c.l.b16 %v504
        %v543 = vunpack.c.l.b16 %v505
        %v544 = vunpack.c.l.b16 %v506
        %v545 = vunpack.c.l.b16 %v507
        %v546 = vunpack.c.l.b16 %v508
        %v547 = vunpack.c.l.b16 %v509
        %v548 = vunpack.c.l.b16 %v510
        %v549 = vunpack.c.l.b16 %v511
        %v550 = vpack.c.b16 %v535, %v534
        %v551 = vpack.c.b16 %v537, %v536
        %v552 = vpack.c.b16 %v539, %v538
        %v553 = vpack.c.b16 %v541, %v540
        %v554 = vpack.c.b16 %v543, %v542
        %v555 = vpack.c.b16 %v545, %v544
        %v556 = vpack.c.b16 %v547, %v546
        %v557 = vpack.c.b16 %v549, %v548
        %566 = vmatprep.subr.bf16.mxu0 0
        %567 = vmatpush1.bf16.msra.mxu0 %v557
        %568 = vmatprep.subr.bf16.mxu0 0
        %569 = vmatpush1.bf16.msra.mxu0 %v556
        %570 = vmatprep.subr.bf16.mxu0 0
        %571 = vmatpush1.bf16.msra.mxu0 %v555
        %572 = vmatprep.subr.bf16.mxu0 0
        %573 = vmatpush1.bf16.msra.mxu0 %v554
        %574 = vmatprep.subr.bf16.mxu0 0
        %575 = vmatpush1.bf16.msra.mxu0 %v553
        %576 = vmatprep.subr.bf16.mxu0 0
        %577 = vmatpush1.bf16.msra.mxu0 %v552
        %578 = vmatprep.subr.bf16.mxu0 0
        %579 = vmatpush1.bf16.msra.mxu0 %v551
        %580 = vmatprep.subr.bf16.mxu0 0
        %581 = vmatpush1.bf16.msra.mxu0 %v550
        %582 = vmatprep.subr.bf16.mxu0 0
        %583 = vmatpush2.bf16.msra.mxu0 0
        %584 = vmatprep.subr.bf16.mxu0 0
        %585 = vmatpush2.bf16.msra.mxu0 0
        %586 = vmatprep.subr.bf16.mxu0 0
        %587 = vmatpush2.bf16.msra.mxu0 0
        %588 = vmatprep.subr.bf16.mxu0 0
        %589 = vmatpush2.bf16.msra.mxu0 0
        %590 = vmatprep.subr.bf16.mxu0 0
        %591 = vmatpush2.bf16.msra.mxu0 0
        %592 = vmatprep.subr.bf16.mxu0 0
        %593 = vmatpush2.bf16.msra.mxu0 0
        %594 = vmatprep.subr.bf16.mxu0 0
        %595 = vmatpush2.bf16.msra.mxu0 0
        %596 = vmatprep.subr.bf16.mxu0 0
        %597 = vmatpush2.bf16.msra.mxu0 0
        %598 = vmatprep.mubr.bf16.mxu0 0
        %599 = vmatmul.mubr.bf16.gmra.mxu0 %v516
        %v600 = vpop.f32.mrf.mxu0
        %v601 = vadd.f32 0.0, %v600
        %v602 = vpop.f32.mrf.mxu0
        %v603 = vpop.f32.mrf.mxu0
        %v604 = vadd.f32 0.0, %v603
        %v605 = vpop.f32.mrf.mxu0
        %606 = vdwg.mxu0
        %v607 = vmul.f32 %v601, %v492
        %v608 = vmul.f32 %v604, %v493
        %v609 = vpack.c.bf16 %v608, %v607
        %v612 = vunpack.c.l.b16 %v477
        %v613 = vunpack.c.l.b16 %v478
        %v614 = vpack.c.b16 %v613, %v612
        %v616 = vsel %vm481, %v614, 0
        %618 = vmatprep.subr.bf16.mxu0 0
        %619 = vmatpush1.bf16.msra.mxu0 0
        %620 = vmatprep.subr.bf16.mxu0 0
        %621 = vmatpush1.bf16.msra.mxu0 0
        %622 = vmatprep.subr.bf16.mxu0 0
        %623 = vmatpush1.bf16.msra.mxu0 0
        %624 = vmatprep.subr.bf16.mxu0 0
        %625 = vmatpush1.bf16.msra.mxu0 0
        %626 = vmatprep.subr.bf16.mxu0 0
        %627 = vmatpush1.bf16.msra.mxu0 0
        %628 = vmatprep.subr.bf16.mxu0 0
        %629 = vmatpush1.bf16.msra.mxu0 0
        %630 = vmatprep.subr.bf16.mxu0 0
        %631 = vmatpush1.bf16.msra.mxu0 0
        %632 = vmatprep.subr.bf16.mxu0 0
        %633 = vmatpush1.bf16.msra.mxu0 %v609
        %634 = vmatprep.subr.bf16.mxu0 0
        %635 = vmatpush2.bf16.msra.mxu0 0
        %636 = vmatprep.subr.bf16.mxu0 0
        %637 = vmatpush2.bf16.msra.mxu0 0
        %638 = vmatprep.subr.bf16.mxu0 0
        %639 = vmatpush2.bf16.msra.mxu0 0
        %640 = vmatprep.subr.bf16.mxu0 0
        %641 = vmatpush2.bf16.msra.mxu0 0
        %642 = vmatprep.subr.bf16.mxu0 0
        %643 = vmatpush2.bf16.msra.mxu0 0
        %644 = vmatprep.subr.bf16.mxu0 0
        %645 = vmatpush2.bf16.msra.mxu0 0
        %646 = vmatprep.subr.bf16.mxu0 0
        %647 = vmatpush2.bf16.msra.mxu0 0
        %648 = vmatprep.subr.bf16.mxu0 0
        %649 = vmatpush2.bf16.msra.mxu0 0
        %650 = vmatprep.mubr.bf16.mxu0 0
        %651 = vmatmul.mubr.bf16.gmra.mxu0 %v616
        %v652 = vpop.f32.mrf.mxu0
        %v653 = vadd.f32 0.0, %v652
        %v654 = vpop.f32.mrf.mxu0
        %v655 = vpop.f32.mrf.mxu0
        %v656 = vadd.f32 0.0, %v655
        %v657 = vpop.f32.mrf.mxu0
        %658 = vdwg.mxu0
        %v659 = vmul.f32 %v653, %v492
        %v660 = vmul.f32 %v656, %v493
        %v661 = vld [vmem:[%s3] sm:$0x1]
        %v663 = vlaneseq
        %v664 = vshrl.u32 %v663, 7
        %v665 = vsub.s32 0, %v664
        %v666 = vrot.slane %v661, %v665
        %v668 = vadd.f32 %v659, %v666
        %v669 = vadd.f32 %v660, %v666
        %v670 = vpack.c.bf16 %v669, %v668
        %v671 = vld [vmem:[#allocation8] sm:$0xf]
        %v672 = vld [vmem:[#allocation8 + $0x4] sm:$0xf]
        %v673 = vld [vmem:[#allocation8 + $0x8] sm:$0xf]
        %v674 = vld [vmem:[#allocation8 + $0xc] sm:$0xf]
        %v675 = vld [vmem:[#allocation8 + $0x10] sm:$0xf]
        %v676 = vld [vmem:[#allocation8 + $0x14] sm:$0xf]
        %v677 = vld [vmem:[#allocation8 + $0x18] sm:$0xf]
        %v678 = vld [vmem:[#allocation8 + $0x1c] sm:$0xf]
        %v679 = vld [vmem:[#allocation8 + $0x20] sm:$0xf]
        %v680 = vld [vmem:[#allocation8 + $0x24] sm:$0xf]
        %v681 = vld [vmem:[#allocation8 + $0x28] sm:$0xf]
        %v682 = vld [vmem:[#allocation8 + $0x2c] sm:$0xf]
        %v683 = vld [vmem:[#allocation8 + $0x30] sm:$0xf]
        %v684 = vld [vmem:[#allocation8 + $0x34] sm:$0xf]
        %v685 = vld [vmem:[#allocation8 + $0x38] sm:$0xf]
        %v686 = vld [vmem:[#allocation8 + $0x3c] sm:$0xf]
        %v703 = vunpack.c.l.b16 %v671
        %v704 = vunpack.c.l.b16 %v672
        %v705 = vunpack.c.l.b16 %v673
        %v706 = vunpack.c.l.b16 %v674
        %v707 = vunpack.c.l.b16 %v675
        %v708 = vunpack.c.l.b16 %v676
        %v709 = vunpack.c.l.b16 %v677
        %v710 = vunpack.c.l.b16 %v678
        %v711 = vunpack.c.l.b16 %v679
        %v712 = vunpack.c.l.b16 %v680
        %v713 = vunpack.c.l.b16 %v681
        %v714 = vunpack.c.l.b16 %v682
        %v715 = vunpack.c.l.b16 %v683
        %v716 = vunpack.c.l.b16 %v684
        %v717 = vunpack.c.l.b16 %v685
        %v718 = vunpack.c.l.b16 %v686
        %v719 = vpack.c.b16 %v704, %v703
        %v720 = vpack.c.b16 %v706, %v705
        %v721 = vpack.c.b16 %v708, %v707
        %v722 = vpack.c.b16 %v710, %v709
        %v723 = vpack.c.b16 %v712, %v711
        %v724 = vpack.c.b16 %v714, %v713
        %v725 = vpack.c.b16 %v716, %v715
        %v726 = vpack.c.b16 %v718, %v717
        %735 = vmatprep.subr.bf16.mxu0 0
        %736 = vmatpush1.bf16.msra.mxu0 %v726
        %737 = vmatprep.subr.bf16.mxu0 0
        %738 = vmatpush1.bf16.msra.mxu0 %v725
        %739 = vmatprep.subr.bf16.mxu0 0
        %740 = vmatpush1.bf16.msra.mxu0 %v724
        %741 = vmatprep.subr.bf16.mxu0 0
        %742 = vmatpush1.bf16.msra.mxu0 %v723
        %743 = vmatprep.subr.bf16.mxu0 0
        %744 = vmatpush1.bf16.msra.mxu0 %v722
        %745 = vmatprep.subr.bf16.mxu0 0
        %746 = vmatpush1.bf16.msra.mxu0 %v721
        %747 = vmatprep.subr.bf16.mxu0 0
        %748 = vmatpush1.bf16.msra.mxu0 %v720
        %749 = vmatprep.subr.bf16.mxu0 0
        %750 = vmatpush1.bf16.msra.mxu0 %v719
        %751 = vmatprep.subr.bf16.mxu0 0
        %752 = vmatpush2.bf16.msra.mxu0 0
        %753 = vmatprep.subr.bf16.mxu0 0
        %754 = vmatpush2.bf16.msra.mxu0 0
        %755 = vmatprep.subr.bf16.mxu0 0
        %756 = vmatpush2.bf16.msra.mxu0 0
        %757 = vmatprep.subr.bf16.mxu0 0
        %758 = vmatpush2.bf16.msra.mxu0 0
        %759 = vmatprep.subr.bf16.mxu0 0
        %760 = vmatpush2.bf16.msra.mxu0 0
        %761 = vmatprep.subr.bf16.mxu0 0
        %762 = vmatpush2.bf16.msra.mxu0 0
        %763 = vmatprep.subr.bf16.mxu0 0
        %764 = vmatpush2.bf16.msra.mxu0 0
        %765 = vmatprep.subr.bf16.mxu0 0
        %766 = vmatpush2.bf16.msra.mxu0 0
        %767 = vmatprep.mubr.bf16.mxu0 0
        %768 = vmatmul.mubr.bf16.gmra.mxu0 %v670
        %v769 = vpop.f32.mrf.mxu0
        %v770 = vadd.f32 0.0, %v769
        %v771 = vpop.f32.mrf.mxu0
        %v772 = vpop.f32.mrf.mxu0
        %v773 = vadd.f32 0.0, %v772
        %v774 = vpop.f32.mrf.mxu0
        %775 = vdwg.mxu0
        %v776 = vmul.f32 %v770, %v492
        %v777 = vmul.f32 %v773, %v493
        %v778 = vpack.c.bf16 %v777, %v776
        %779 = vmatprep.subr.bf16.mxu0 0
        %780 = vmatpush1.bf16.msra.mxu0 0
        %781 = vmatprep.subr.bf16.mxu0 0
        %782 = vmatpush1.bf16.msra.mxu0 0
        %783 = vmatprep.subr.bf16.mxu0 0
        %784 = vmatpush1.bf16.msra.mxu0 0
        %785 = vmatprep.subr.bf16.mxu0 0
        %786 = vmatpush1.bf16.msra.mxu0 0
        %787 = vmatprep.subr.bf16.mxu0 0
        %788 = vmatpush1.bf16.msra.mxu0 0
        %789 = vmatprep.subr.bf16.mxu0 0
        %790 = vmatpush1.bf16.msra.mxu0 0
        %791 = vmatprep.subr.bf16.mxu0 0
        %792 = vmatpush1.bf16.msra.mxu0 0
        %793 = vmatprep.subr.bf16.mxu0 0
        %794 = vmatpush1.bf16.msra.mxu0 %v778
        %795 = vmatprep.subr.bf16.mxu0 0
        %796 = vmatpush2.bf16.msra.mxu0 0
        %797 = vmatprep.subr.bf16.mxu0 0
        %798 = vmatpush2.bf16.msra.mxu0 0
        %799 = vmatprep.subr.bf16.mxu0 0
        %800 = vmatpush2.bf16.msra.mxu0 0
        %801 = vmatprep.subr.bf16.mxu0 0
        %802 = vmatpush2.bf16.msra.mxu0 0
        %803 = vmatprep.subr.bf16.mxu0 0
        %804 = vmatpush2.bf16.msra.mxu0 0
        %805 = vmatprep.subr.bf16.mxu0 0
        %806 = vmatpush2.bf16.msra.mxu0 0
        %807 = vmatprep.subr.bf16.mxu0 0
        %808 = vmatpush2.bf16.msra.mxu0 0
        %809 = vmatprep.subr.bf16.mxu0 0
        %810 = vmatpush2.bf16.msra.mxu0 0
        %811 = vmatprep.mubr.bf16.mxu0 0
        %812 = vmatmul.mubr.bf16.gmra.mxu0 %v616
        %v813 = vpop.f32.mrf.mxu0
        %v814 = vadd.f32 0.0, %v813
        %v815 = vpop.f32.mrf.mxu0
        %v816 = vpop.f32.mrf.mxu0
        %v817 = vadd.f32 0.0, %v816
        %v818 = vpop.f32.mrf.mxu0
        %819 = vdwg.mxu0
        %v820 = vmul.f32 %v814, %v492
        %v821 = vmul.f32 %v817, %v493
        %v822 = vld [vmem:[%s5] sm:$0x1]
        %v824 = vlaneseq
        %v825 = vshrl.u32 %v824, 7
        %v826 = vsub.s32 0, %v825
        %v827 = vrot.slane %v822, %v826
        %v829 = vadd.f32 %v820, %v827
        %v830 = vadd.f32 %v821, %v827
        %v831 = vmax.f32 %v829, 0.0
        %v832 = vmax.f32 %v830, 0.0
        %v833 = vpack.c.bf16 %v832, %v831
        %v834 = vld [vmem:[#allocation10] sm:$0xf]
        %v835 = vld [vmem:[#allocation10 + $0x4] sm:$0xf]
        %v836 = vld [vmem:[#allocation10 + $0x8] sm:$0xf]
        %v837 = vld [vmem:[#allocation10 + $0xc] sm:$0xf]
        %v838 = vld [vmem:[#allocation10 + $0x10] sm:$0xf]
        %v839 = vld [vmem:[#allocation10 + $0x14] sm:$0xf]
        %v840 = vld [vmem:[#allocation10 + $0x18] sm:$0xf]
        %v841 = vld [vmem:[#allocation10 + $0x1c] sm:$0xf]
        %v842 = vld [vmem:[#allocation10 + $0x20] sm:$0xf]
        %v843 = vld [vmem:[#allocation10 + $0x24] sm:$0xf]
        %v844 = vld [vmem:[#allocation10 + $0x28] sm:$0xf]
        %v845 = vld [vmem:[#allocation10 + $0x2c] sm:$0xf]
        %v846 = vld [vmem:[#allocation10 + $0x30] sm:$0xf]
        %v847 = vld [vmem:[#allocation10 + $0x34] sm:$0xf]
        %v848 = vld [vmem:[#allocation10 + $0x38] sm:$0xf]
        %v849 = vld [vmem:[#allocation10 + $0x3c] sm:$0xf]
        %v850 = vld [vmem:[%s7] sm:$0x1]
        %v852 = vlaneseq
        %v853 = vshrl.u32 %v852, 7
        %v854 = vsub.s32 0, %v853
        %v855 = vrot.slane %v850, %v854
        %v873 = vunpack.c.l.b16 %v834
        %v874 = vunpack.c.l.b16 %v835
        %v875 = vunpack.c.l.b16 %v836
        %v876 = vunpack.c.l.b16 %v837
        %v877 = vunpack.c.l.b16 %v838
        %v878 = vunpack.c.l.b16 %v839
        %v879 = vunpack.c.l.b16 %v840
        %v880 = vunpack.c.l.b16 %v841
        %v881 = vunpack.c.l.b16 %v842
        %v882 = vunpack.c.l.b16 %v843
        %v883 = vunpack.c.l.b16 %v844
        %v884 = vunpack.c.l.b16 %v845
        %v885 = vunpack.c.l.b16 %v846
        %v886 = vunpack.c.l.b16 %v847
        %v887 = vunpack.c.l.b16 %v848
        %v888 = vunpack.c.l.b16 %v849
        %v889 = vpack.c.b16 %v874, %v873
        %v890 = vpack.c.b16 %v876, %v875
        %v891 = vpack.c.b16 %v878, %v877
        %v892 = vpack.c.b16 %v880, %v879
        %v893 = vpack.c.b16 %v882, %v881
        %v894 = vpack.c.b16 %v884, %v883
        %v895 = vpack.c.b16 %v886, %v885
        %v896 = vpack.c.b16 %v888, %v887
        %905 = vmatprep.subr.bf16.mxu0 0
        %906 = vmatpush1.bf16.msra.mxu0 %v896
        %907 = vmatprep.subr.bf16.mxu0 0
        %908 = vmatpush1.bf16.msra.mxu0 %v895
        %909 = vmatprep.subr.bf16.mxu0 0
        %910 = vmatpush1.bf16.msra.mxu0 %v894
        %911 = vmatprep.subr.bf16.mxu0 0
        %912 = vmatpush1.bf16.msra.mxu0 %v893
        %913 = vmatprep.subr.bf16.mxu0 0
        %914 = vmatpush1.bf16.msra.mxu0 %v892
        %915 = vmatprep.subr.bf16.mxu0 0
        %916 = vmatpush1.bf16.msra.mxu0 %v891
        %917 = vmatprep.subr.bf16.mxu0 0
        %918 = vmatpush1.bf16.msra.mxu0 %v890
        %919 = vmatprep.subr.bf16.mxu0 0
        %920 = vmatpush1.bf16.msra.mxu0 %v889
        %921 = vmatprep.subr.bf16.mxu0 0
        %922 = vmatpush2.bf16.msra.mxu0 0
        %923 = vmatprep.subr.bf16.mxu0 0
        %924 = vmatpush2.bf16.msra.mxu0 0
        %925 = vmatprep.subr.bf16.mxu0 0
        %926 = vmatpush2.bf16.msra.mxu0 0
        %927 = vmatprep.subr.bf16.mxu0 0
        %928 = vmatpush2.bf16.msra.mxu0 0
        %929 = vmatprep.subr.bf16.mxu0 0
        %930 = vmatpush2.bf16.msra.mxu0 0
        %931 = vmatprep.subr.bf16.mxu0 0
        %932 = vmatpush2.bf16.msra.mxu0 0
        %933 = vmatprep.subr.bf16.mxu0 0
        %934 = vmatpush2.bf16.msra.mxu0 0
        %935 = vmatprep.subr.bf16.mxu0 0
        %936 = vmatpush2.bf16.msra.mxu0 0
        %937 = vmatprep.mubr.bf16.mxu0 0
        %938 = vmatmul.mubr.bf16.gmra.mxu0 %v833
        %v939 = vpop.f32.mrf.mxu0
        %v940 = vadd.f32 %v855, %v939
        %v941 = vpop.f32.mrf.mxu0
        %v942 = vpop.f32.mrf.mxu0
        %v943 = vadd.f32 %v855, %v942
        %v944 = vpop.f32.mrf.mxu0
        %945 = vdwg.mxu0
        %v946 = vmax.f32 %v940, 0.0
        %v947 = vmax.f32 %v943, 0.0
        %v948 = vpack.c.bf16 %v947, %v946
        %v949 = vld [vmem:[#allocation11] sm:$0xf]
        %v950 = vld [vmem:[#allocation11 + $0x4] sm:$0xf]
        %v951 = vld [vmem:[#allocation11 + $0x8] sm:$0xf]
        %v952 = vld [vmem:[#allocation11 + $0xc] sm:$0xf]
        %v953 = vld [vmem:[#allocation11 + $0x10] sm:$0xf]
        %v954 = vld [vmem:[#allocation11 + $0x14] sm:$0xf]
        %v955 = vld [vmem:[#allocation11 + $0x18] sm:$0xf]
        %v956 = vld [vmem:[#allocation11 + $0x1c] sm:$0xf]
        %v957 = vld [vmem:[#allocation11 + $0x20] sm:$0xf]
        %v958 = vld [vmem:[#allocation11 + $0x24] sm:$0xf]
        %v959 = vld [vmem:[#allocation11 + $0x28] sm:$0xf]
        %v960 = vld [vmem:[#allocation11 + $0x2c] sm:$0xf]
        %v961 = vld [vmem:[#allocation11 + $0x30] sm:$0xf]
        %v962 = vld [vmem:[#allocation11 + $0x34] sm:$0xf]
        %v963 = vld [vmem:[#allocation11 + $0x38] sm:$0xf]
        %v964 = vld [vmem:[#allocation11 + $0x3c] sm:$0xf]
        %v965 = vld [vmem:[%s9] sm:$0x1]
        %v967 = vlaneseq
        %v968 = vshrl.u32 %v967, 7
        %v969 = vsub.s32 0, %v968
        %v970 = vrot.slane %v965, %v969
        %v988 = vunpack.c.l.b16 %v949
        %v989 = vunpack.c.l.b16 %v950
        %v990 = vunpack.c.l.b16 %v951
        %v991 = vunpack.c.l.b16 %v952
        %v992 = vunpack.c.l.b16 %v953
        %v993 = vunpack.c.l.b16 %v954
        %v994 = vunpack.c.l.b16 %v955
        %v995 = vunpack.c.l.b16 %v956
        %v996 = vunpack.c.l.b16 %v957
        %v997 = vunpack.c.l.b16 %v958
        %v998 = vunpack.c.l.b16 %v959
        %v999 = vunpack.c.l.b16 %v960
        %v1000 = vunpack.c.l.b16 %v961
        %v1001 = vunpack.c.l.b16 %v962
        %v1002 = vunpack.c.l.b16 %v963
        %v1003 = vunpack.c.l.b16 %v964
        %v1004 = vpack.c.b16 %v989, %v988
        %v1005 = vpack.c.b16 %v991, %v990
        %v1006 = vpack.c.b16 %v993, %v992
        %v1007 = vpack.c.b16 %v995, %v994
        %v1008 = vpack.c.b16 %v997, %v996
        %v1009 = vpack.c.b16 %v999, %v998
        %v1010 = vpack.c.b16 %v1001, %v1000
        %v1011 = vpack.c.b16 %v1003, %v1002
        %1020 = vmatprep.subr.bf16.mxu0 0
        %1021 = vmatpush1.bf16.msra.mxu0 %v1011
        %1022 = vmatprep.subr.bf16.mxu0 0
        %1023 = vmatpush1.bf16.msra.mxu0 %v1010
        %1024 = vmatprep.subr.bf16.mxu0 0
        %1025 = vmatpush1.bf16.msra.mxu0 %v1009
        %1026 = vmatprep.subr.bf16.mxu0 0
        %1027 = vmatpush1.bf16.msra.mxu0 %v1008
        %1028 = vmatprep.subr.bf16.mxu0 0
        %1029 = vmatpush1.bf16.msra.mxu0 %v1007
        %1030 = vmatprep.subr.bf16.mxu0 0
        %1031 = vmatpush1.bf16.msra.mxu0 %v1006
        %1032 = vmatprep.subr.bf16.mxu0 0
        %1033 = vmatpush1.bf16.msra.mxu0 %v1005
        %1034 = vmatprep.subr.bf16.mxu0 0
        %1035 = vmatpush1.bf16.msra.mxu0 %v1004
        %1036 = vmatprep.subr.bf16.mxu0 0
        %1037 = vmatpush2.bf16.msra.mxu0 0
        %1038 = vmatprep.subr.bf16.mxu0 0
        %1039 = vmatpush2.bf16.msra.mxu0 0
        %1040 = vmatprep.subr.bf16.mxu0 0
        %1041 = vmatpush2.bf16.msra.mxu0 0
        %1042 = vmatprep.subr.bf16.mxu0 0
        %1043 = vmatpush2.bf16.msra.mxu0 0
        %1044 = vmatprep.subr.bf16.mxu0 0
        %1045 = vmatpush2.bf16.msra.mxu0 0
        %1046 = vmatprep.subr.bf16.mxu0 0
        %1047 = vmatpush2.bf16.msra.mxu0 0
        %1048 = vmatprep.subr.bf16.mxu0 0
        %1049 = vmatpush2.bf16.msra.mxu0 0
        %1050 = vmatprep.subr.bf16.mxu0 0
        %1051 = vmatpush2.bf16.msra.mxu0 0
        %1052 = vmatprep.mubr.bf16.mxu0 0
        %1053 = vmatmul.mubr.bf16.gmra.mxu0 %v948
        %v1054 = vpop.f32.mrf.mxu0
        %v1055 = vadd.f32 %v970, %v1054
        %v1056 = vpop.f32.mrf.mxu0
        %v1057 = vpop.f32.mrf.mxu0
        %v1058 = vadd.f32 %v970, %v1057
        %v1059 = vpop.f32.mrf.mxu0
        %1060 = vdwg.mxu0
        %1061 = vst [vmem:[%s475] sm:$0xff] %v1055
        %1062 = vst [vmem:[%s475 + $0x8] sm:$0xff] %v1058
        %s1063 = sand.u32 %s260, 1
        %s1064 = scalar_lea.sflag [#allocation4], %s1063
        %s1065 = sand.u32 %s260, 1
        %s1066 = smul.addr %s1065, 16
        %s1067 = scalar_lea.vmem [#allocation13], %s1066
        // Predicated region
        $region85: #{tpu_custom_call.1} parent=59 // pred_check
          %p1068 = pneg %p270
        $region86: #{tpu_custom_call.1} parent=59 // pred_check_branch
          %1070 = sbr.rel (%p1068) target = $region88
        $region87: #{tpu_custom_call.1} parent=59 // pred_region
          %s1072 = ssub.s32 256, 256
          %1073 = vsyncadd %s1064, %s1072
          %s1074 = smul.addr %s32, 2
          %s1075 = smul.addr %s1074, 128
          %s1076 = scalar_lea.hbm %s10, %s1075
          %s1077 = sshll.u32 %s1067, 4
          %s1078 = int_to_ptr.vmem [resolvable:$true] %s1077
          %1083 = dma.vmem_to_hbm [thread:$0]  %s1078, 256, %s1076, %s1064, 128, 128, 8
        $region88: #{tpu_custom_call.1} parent=59 // pred_fallthru
          _
      $region60: #{tpu_custom_call.1} parent=5 // pred_fallthru
        _
      %p1084 = scmp.le.s32.totalorder 2, %s27
      // Predicated region
      $region89: #{tpu_custom_call.1} parent=5 // pred_check
        %p1085 = pneg %p1084
      $region90: #{tpu_custom_call.1} parent=5 // pred_check_branch
        %1087 = sbr.rel (%p1085) target = $region92
      $region91: #{tpu_custom_call.1} parent=5 // pred_region
        %s1088 = ssub.s32 %s27, 2
        // Predicated region
        $region93: #{tpu_custom_call.1} parent=91 // pred_check
          %p1089 = pneg %p276
        $region94: #{tpu_custom_call.1} parent=91 // pred_check_branch
          %1091 = sbr.rel (%p1089) target = $region96
        $region95: #{tpu_custom_call.1} parent=91 // pred_region
          %s1092 = sand.u32 %s261, 1
          %s1093 = scalar_lea.sflag [#allocation4], %s1092
          %s1094 = sand.u32 %s261, 1
          %s1095 = smul.addr %s1094, 16
          %s1096 = scalar_lea.vmem [#allocation13], %s1095
          %1097 = dma.done %s1093, 256
        $region96: #{tpu_custom_call.1} parent=91 // pred_fallthru
          _
      $region92: #{tpu_custom_call.1} parent=5 // pred_fallthru
        _
    $region6: #{tpu_custom_call.1} parent=1 // loop_footer
      %s31 = sadd.s32 1, %s27
    $region7: #{tpu_custom_call.1} parent=1 // loop_footer_branch
      %26 = sbr.rel target = $region3
    $region8: #{tpu_custom_call.1} parent=1 // loop_exit
      _
    %1098 = vsyncpa [#allocation3], 1
    %s1099 = scalar_lea.sflag [#allocation3], 1
    %1100 = vsyncpa %s1099, 1
    %1101 = vsyncpa [#allocation6], 1
    %s1102 = scalar_lea.sflag [#allocation6], 1
    %1103 = vsyncpa %s1102, 1
    %1104 = vsyncpa [#allocation9], 1
    %1105 = vsyncpa [#allocation12], 1
    %1106 = vsyncpa [#allocation4], 1
    %s1107 = scalar_lea.sflag [#allocation4], 1
    %1108 = vsyncpa %s1107, 1

</llo_original>
